<compile_context>
chip_gen: v6e
topology: v6e:2x2x1
jax: 0.10.0
libtpu: 0.0.40
codegen_flags: <defaults>
</compile_context>

<pallas_src>
import jax
import jax.numpy as jnp
from jax.experimental import pallas as pl
from jax.experimental.pallas import tpu as pltpu


def _round_up(x, m):
    return ((x + m - 1) // m) * m


def _round_down(x, m):
    return (x // m) * m


# ----------------------------- kernels -------------------------------------


def _outconv_vpu_kernel(x_ref, w_ref, b_ref, o_ref):
    """Small-channel path: unrolled broadcast multiply-adds on the VPU.

    x_ref: (Nb, C_in,  tS, 128) or (Nb, C_in,  tHW)   VMEM
    w_ref: (C_out, C_in)                               SMEM float32
    b_ref: (C_out,)                                    SMEM float32
    o_ref: (Nb, C_out, tS, 128) or (Nb, C_out, tHW)   VMEM
    """
    c_out, c_in = w_ref.shape
    for o in range(c_out):  # fully unrolled (tiny channel counts)
        # f32 scalar * x promotes to f32 -> f32 accumulation regardless of
        # the input dtype; cast back only at the store.
        acc = w_ref[o, 0] * x_ref[:, 0:1] + b_ref[o]
        for c in range(1, c_in):
            acc = acc + w_ref[o, c] * x_ref[:, c:c + 1]
        o_ref[:, o:o + 1] = acc.astype(o_ref.dtype)


def _outconv_mxu_kernel(x_ref, w_ref, b_ref, o_ref):
    """Larger-channel path: per-image MXU matmul.

    x_ref: (Nb, C_in, tHW) VMEM   w_ref: (C_out, C_in) VMEM
    b_ref: (C_out, 1)      VMEM   o_ref: (Nb, C_out, tHW) VMEM
    """
    w = w_ref[...]
    b = b_ref[...].astype(jnp.float32)
    nb = x_ref.shape[0]
    for n in range(nb):  # Nb is small & static (capped in the wrapper)
        acc = jnp.dot(w, x_ref[n], preferred_element_type=jnp.float32)
        o_ref[n] = (acc + b).astype(o_ref.dtype)


# ----------------------------- wrapper --------------------------------------


def out_conv(x_nchw, weight, bias, *, target_block_bytes=8 << 20):
    """1x1 Conv2d forward (NCHW), matching nn.Conv2d(in, out, kernel_size=1).

    x_nchw: (N, C_in, H, W)
    weight: (C_out, C_in, 1, 1)
    bias:   (C_out,)
    returns (N, C_out, H, W)
    """
    N, C_in, H, W = x_nchw.shape
    C_out = weight.shape[0]
    HW = H * W
    dtype = x_nchw.dtype
    itemsize = jnp.dtype(dtype).itemsize

    # Free (layout-preserving) reshapes — no transpose, no pad, no slice.
    x3d = x_nchw.reshape(N, C_in, HW)
    w2d = weight.reshape(C_out, C_in)

    use_vpu = (C_in <= 8) and (C_out <= 8)
    dense4d = use_vpu and (HW % 128 == 0)  # sublane-dense (tS, 128) slabs

    # ---- VMEM budget: ~75% of physical, generation-aware, with headroom ----
    try:
        phys_vmem = int(pltpu.get_tpu_info().vmem_capacity_bytes)
        phys_vmem = min(max(phys_vmem, 32 << 20), 128 << 20)
    except Exception:
        phys_vmem = 64 << 20                 # conservative (v7x per-core)
    vmem_budget = (phys_vmem * 3) // 4       # ~48 MiB v7x, ~96 MiB v5e/v6e

    # ---- adaptive tile selection: target a few MiB of DMA per grid step ----
    # Divide by 4: 2x double-buffered (in+out) blocks plus room for f32
    # intermediates inside the kernel body.
    max_block_bytes = max(1 << 20, (vmem_budget - (8 << 20)) // 4)
    tgt_bytes = min(target_block_bytes, max_block_bytes)

    per_col = (C_in + C_out) * itemsize      # bytes per spatial position/image
    HW_pad = _round_up(HW, 128)
    target_cols = max(128, tgt_bytes // per_col)
    max_cols = max(128, max_block_bytes // per_col)

    if HW_pad <= target_cols:
        # Small feature maps: whole image per step; batch images to reach the
        # target per-step DMA size.
        tHW = HW_pad
        Nb = int(min(N, max(1, target_cols // HW_pad)))
        Nb = int(max(1, min(Nb, max_cols // HW_pad)))
        if not use_vpu:
            Nb = min(Nb, 8)                  # bound the unrolled MXU loop
    else:
        # Large feature maps: one image per step, large lane tile.
        Nb = 1
        tHW = int(min(HW_pad, max(_round_down(target_cols, 128),
                                  min(2048, HW_pad))))      # DMA-strip floor
        tHW = int(min(tHW, max(128, _round_down(max_cols, 128))))

    if dense4d:
        S = HW // 128
        tS = max(1, tHW // 128)
        if tS < S:
            tS = min(S, max(8, _round_down(tS, 8)))   # (8,128) tiling rule
        grid = (pl.cdiv(N, Nb), pl.cdiv(S, tS))
        x_in = x3d.reshape(N, C_in, S, 128)           # free row-major split
        x_spec = pl.BlockSpec((Nb, C_in, tS, 128), lambda n, j: (n, 0, j, 0))
        o_spec = pl.BlockSpec((Nb, C_out, tS, 128), lambda n, j: (n, 0, j, 0))
        out_struct = jax.ShapeDtypeStruct((N, C_out, S, 128), dtype)
        block_cols = Nb * tS * 128
    else:
        grid = (pl.cdiv(N, Nb), pl.cdiv(HW, tHW))
        x_in = x3d
        x_spec = pl.BlockSpec((Nb, C_in, tHW), lambda n, j: (n, 0, j))
        o_spec = pl.BlockSpec((Nb, C_out, tHW), lambda n, j: (n, 0, j))
        out_struct = jax.ShapeDtypeStruct((N, C_out, HW), dtype)
        block_cols = Nb * tHW

    if use_vpu:
        kernel = _outconv_vpu_kernel
        # SMEM is 32-bit scalar memory: always stage weights/bias as float32.
        w_arg = w2d.astype(jnp.float32)
        b_arg = bias.astype(jnp.float32)
        w_spec = pl.BlockSpec(memory_space=pltpu.MemorySpace.SMEM)
        b_spec = pl.BlockSpec(memory_space=pltpu.MemorySpace.SMEM)
    else:
        kernel = _outconv_mxu_kernel
        w_arg = w2d
        b_arg = bias.reshape(C_out, 1)
        w_spec = pl.BlockSpec((C_out, C_in), lambda n, j: (0, 0))
        b_spec = pl.BlockSpec((C_out, 1), lambda n, j: (0, 0))

    block_bytes = (C_in + C_out) * block_cols * itemsize
    vmem_limit = int(min(vmem_budget, max(4 * block_bytes + (8 << 20), 16 << 20)))

    cost = pl.CostEstimate(
        flops=2 * N * HW * C_in * C_out,
        transcendentals=0,
        bytes_accessed=(x3d.size + N * C_out * HW + w2d.size + bias.size) * itemsize,
    )

    y = pl.pallas_call(
        kernel,
        out_shape=out_struct,
        grid_spec=pltpu.PrefetchScalarGridSpec(
            num_scalar_prefetch=0,
            grid=grid,
            in_specs=[x_spec, w_spec, b_spec],
            out_specs=o_spec,
        ),
        compiler_params=pltpu.CompilerParams(
            dimension_semantics=("parallel", "parallel"),
            vmem_limit_bytes=vmem_limit,
        ),
        cost_estimate=cost,
    )(x_in, w_arg, b_arg)

    return y.reshape(N, C_out, H, W)


if __name__ == "__main__":
    # Deterministic synthetic parameters & input (mimics OutConv(in=4, out=3)).
    N, C_in, H, W = 2, 4, 16, 16
    C_out = 3

    key = jax.random.PRNGKey(0)
    kx, kw, kb = jax.random.split(key, 3)

    x = jax.random.normal(kx, (N, C_in, H, W), dtype=jnp.float32)
    # PyTorch Conv2d default init: uniform(-1/sqrt(fan_in), 1/sqrt(fan_in)).
    bound = 1.0 / jnp.sqrt(jnp.float32(C_in * 1 * 1))
    weight = jax.random.uniform(kw, (C_out, C_in, 1, 1), jnp.float32, -bound, bound)
    bias = jax.random.uniform(kb, (C_out,), jnp.float32, -bound, bound)

    y = out_conv(x, weight, bias)
    y = jax.block_until_ready(y)

    # Reference: pure-JAX 1x1 conv as an einsum over channels.
    y_ref = jnp.einsum("nchw,oc->nohw", x, weight.reshape(C_out, C_in)) \
        + bias[None, :, None, None]
    assert y.shape == (N, C_out, H, W)
    assert jnp.allclose(y, y_ref, atol=1e-5, rtol=1e-5)

    print("KERNEL_OK")
</pallas_src>

<mosaic_0001>
module attributes {stable_mosaic.version = 11 : i64} {
  func.func @_outconv_vpu_kernel(%arg0: i32, %arg1: i32, %arg2: memref<2x4x2x128xf32, #tpu.memory_space<vmem>>, %arg3: memref<3x4xf32, #tpu.memory_space<smem>>, %arg4: memref<3xf32, #tpu.memory_space<smem>>, %arg5: memref<2x3x2x128xf32, #tpu.memory_space<vmem>>) attributes {dimension_semantics = [#tpu.dimension_semantics<parallel>, #tpu.dimension_semantics<parallel>], iteration_bounds = array<i64: 1, 1>, scalar_prefetch = 0 : i64, scratch_operands = 0 : i64, tpu.core_type = #tpu.core_type<tc>, window_params = [{transform_indices = @transform_0, window_bounds = array<i64: 2, 4, 2, 128>}, {transform_indices = @transform_1, window_bounds = array<i64: 3, 4>}, {transform_indices = @transform_2, window_bounds = array<i64: 3>}, {transform_indices = @transform_3, window_bounds = array<i64: 2, 3, 2, 128>}]} {
    %c0 = arith.constant 0 : index
    %c0_0 = arith.constant 0 : index
    %0 = memref.load %arg3[%c0, %c0_0] : memref<3x4xf32, #tpu.memory_space<smem>>
    %c0_1 = arith.constant 0 : index
    %c0_2 = arith.constant 0 : index
    %c0_3 = arith.constant 0 : index
    %c0_4 = arith.constant 0 : index
    %1 = vector.load %arg2[%c0_1, %c0_2, %c0_3, %c0_4] : memref<2x4x2x128xf32, #tpu.memory_space<vmem>>, vector<2x1x2x128xf32>
    %2 = vector.broadcast %0 : f32 to vector<2x1x2x128xf32>
    %3 = arith.mulf %2, %1 : vector<2x1x2x128xf32>
    %c0_5 = arith.constant 0 : index
    %4 = memref.load %arg4[%c0_5] : memref<3xf32, #tpu.memory_space<smem>>
    %5 = vector.broadcast %4 : f32 to vector<2x1x2x128xf32>
    %6 = arith.addf %3, %5 : vector<2x1x2x128xf32>
    %c0_6 = arith.constant 0 : index
    %c1 = arith.constant 1 : index
    %7 = memref.load %arg3[%c0_6, %c1] : memref<3x4xf32, #tpu.memory_space<smem>>
    %c0_7 = arith.constant 0 : index
    %c1_8 = arith.constant 1 : index
    %c0_9 = arith.constant 0 : index
    %c0_10 = arith.constant 0 : index
    %8 = vector.load %arg2[%c0_7, %c1_8, %c0_9, %c0_10] : memref<2x4x2x128xf32, #tpu.memory_space<vmem>>, vector<2x1x2x128xf32>
    %9 = vector.broadcast %7 : f32 to vector<2x1x2x128xf32>
    %10 = arith.mulf %9, %8 : vector<2x1x2x128xf32>
    %11 = arith.addf %6, %10 : vector<2x1x2x128xf32>
    %c0_11 = arith.constant 0 : index
    %c2 = arith.constant 2 : index
    %12 = memref.load %arg3[%c0_11, %c2] : memref<3x4xf32, #tpu.memory_space<smem>>
    %c0_12 = arith.constant 0 : index
    %c2_13 = arith.constant 2 : index
    %c0_14 = arith.constant 0 : index
    %c0_15 = arith.constant 0 : index
    %13 = vector.load %arg2[%c0_12, %c2_13, %c0_14, %c0_15] : memref<2x4x2x128xf32, #tpu.memory_space<vmem>>, vector<2x1x2x128xf32>
    %14 = vector.broadcast %12 : f32 to vector<2x1x2x128xf32>
    %15 = arith.mulf %14, %13 : vector<2x1x2x128xf32>
    %16 = arith.addf %11, %15 : vector<2x1x2x128xf32>
    %c0_16 = arith.constant 0 : index
    %c3 = arith.constant 3 : index
    %17 = memref.load %arg3[%c0_16, %c3] : memref<3x4xf32, #tpu.memory_space<smem>>
    %c0_17 = arith.constant 0 : index
    %c3_18 = arith.constant 3 : index
    %c0_19 = arith.constant 0 : index
    %c0_20 = arith.constant 0 : index
    %18 = vector.load %arg2[%c0_17, %c3_18, %c0_19, %c0_20] : memref<2x4x2x128xf32, #tpu.memory_space<vmem>>, vector<2x1x2x128xf32>
    %19 = vector.broadcast %17 : f32 to vector<2x1x2x128xf32>
    %20 = arith.mulf %19, %18 : vector<2x1x2x128xf32>
    %21 = arith.addf %16, %20 : vector<2x1x2x128xf32>
    %c0_21 = arith.constant 0 : index
    %c0_22 = arith.constant 0 : index
    %c0_23 = arith.constant 0 : index
    %c0_24 = arith.constant 0 : index
    %22 = vector.load %arg5[%c0_21, %c0_22, %c0_23, %c0_24] : memref<2x3x2x128xf32, #tpu.memory_space<vmem>>, vector<2x1x2x128xf32>
    tpu.vector_store %arg5[%c0_21, %c0_22, %c0_23, %c0_24], %21 {strides = array<i32>} : memref<2x3x2x128xf32, #tpu.memory_space<vmem>>, vector<2x1x2x128xf32>,
    %c1_25 = arith.constant 1 : index
    %c0_26 = arith.constant 0 : index
    %23 = memref.load %arg3[%c1_25, %c0_26] : memref<3x4xf32, #tpu.memory_space<smem>>
    %c0_27 = arith.constant 0 : index
    %c0_28 = arith.constant 0 : index
    %c0_29 = arith.constant 0 : index
    %c0_30 = arith.constant 0 : index
    %24 = vector.load %arg2[%c0_27, %c0_28, %c0_29, %c0_30] : memref<2x4x2x128xf32, #tpu.memory_space<vmem>>, vector<2x1x2x128xf32>
    %25 = vector.broadcast %23 : f32 to vector<2x1x2x128xf32>
    %26 = arith.mulf %25, %24 : vector<2x1x2x128xf32>
    %c1_31 = arith.constant 1 : index
    %27 = memref.load %arg4[%c1_31] : memref<3xf32, #tpu.memory_space<smem>>
    %28 = vector.broadcast %27 : f32 to vector<2x1x2x128xf32>
    %29 = arith.addf %26, %28 : vector<2x1x2x128xf32>
    %c1_32 = arith.constant 1 : index
    %c1_33 = arith.constant 1 : index
    %30 = memref.load %arg3[%c1_32, %c1_33] : memref<3x4xf32, #tpu.memory_space<smem>>
    %c0_34 = arith.constant 0 : index
    %c1_35 = arith.constant 1 : index
    %c0_36 = arith.constant 0 : index
    %c0_37 = arith.constant 0 : index
    %31 = vector.load %arg2[%c0_34, %c1_35, %c0_36, %c0_37] : memref<2x4x2x128xf32, #tpu.memory_space<vmem>>, vector<2x1x2x128xf32>
    %32 = vector.broadcast %30 : f32 to vector<2x1x2x128xf32>
    %33 = arith.mulf %32, %31 : vector<2x1x2x128xf32>
    %34 = arith.addf %29, %33 : vector<2x1x2x128xf32>
    %c1_38 = arith.constant 1 : index
    %c2_39 = arith.constant 2 : index
    %35 = memref.load %arg3[%c1_38, %c2_39] : memref<3x4xf32, #tpu.memory_space<smem>>
    %c0_40 = arith.constant 0 : index
    %c2_41 = arith.constant 2 : index
    %c0_42 = arith.constant 0 : index
    %c0_43 = arith.constant 0 : index
    %36 = vector.load %arg2[%c0_40, %c2_41, %c0_42, %c0_43] : memref<2x4x2x128xf32, #tpu.memory_space<vmem>>, vector<2x1x2x128xf32>
    %37 = vector.broadcast %35 : f32 to vector<2x1x2x128xf32>
    %38 = arith.mulf %37, %36 : vector<2x1x2x128xf32>
    %39 = arith.addf %34, %38 : vector<2x1x2x128xf32>
    %c1_44 = arith.constant 1 : index
    %c3_45 = arith.constant 3 : index
    %40 = memref.load %arg3[%c1_44, %c3_45] : memref<3x4xf32, #tpu.memory_space<smem>>
    %c0_46 = arith.constant 0 : index
    %c3_47 = arith.constant 3 : index
    %c0_48 = arith.constant 0 : index
    %c0_49 = arith.constant 0 : index
    %41 = vector.load %arg2[%c0_46, %c3_47, %c0_48, %c0_49] : memref<2x4x2x128xf32, #tpu.memory_space<vmem>>, vector<2x1x2x128xf32>
    %42 = vector.broadcast %40 : f32 to vector<2x1x2x128xf32>
    %43 = arith.mulf %42, %41 : vector<2x1x2x128xf32>
    %44 = arith.addf %39, %43 : vector<2x1x2x128xf32>
    %c0_50 = arith.constant 0 : index
    %c1_51 = arith.constant 1 : index
    %c0_52 = arith.constant 0 : index
    %c0_53 = arith.constant 0 : index
    %45 = vector.load %arg5[%c0_50, %c1_51, %c0_52, %c0_53] : memref<2x3x2x128xf32, #tpu.memory_space<vmem>>, vector<2x1x2x128xf32>
    tpu.vector_store %arg5[%c0_50, %c1_51, %c0_52, %c0_53], %44 {strides = array<i32>} : memref<2x3x2x128xf32, #tpu.memory_space<vmem>>, vector<2x1x2x128xf32>,
    %c2_54 = arith.constant 2 : index
    %c0_55 = arith.constant 0 : index
    %46 = memref.load %arg3[%c2_54, %c0_55] : memref<3x4xf32, #tpu.memory_space<smem>>
    %c0_56 = arith.constant 0 : index
    %c0_57 = arith.constant 0 : index
    %c0_58 = arith.constant 0 : index
    %c0_59 = arith.constant 0 : index
    %47 = vector.load %arg2[%c0_56, %c0_57, %c0_58, %c0_59] : memref<2x4x2x128xf32, #tpu.memory_space<vmem>>, vector<2x1x2x128xf32>
    %48 = vector.broadcast %46 : f32 to vector<2x1x2x128xf32>
    %49 = arith.mulf %48, %47 : vector<2x1x2x128xf32>
    %c2_60 = arith.constant 2 : index
    %50 = memref.load %arg4[%c2_60] : memref<3xf32, #tpu.memory_space<smem>>
    %51 = vector.broadcast %50 : f32 to vector<2x1x2x128xf32>
    %52 = arith.addf %49, %51 : vector<2x1x2x128xf32>
    %c2_61 = arith.constant 2 : index
    %c1_62 = arith.constant 1 : index
    %53 = memref.load %arg3[%c2_61, %c1_62] : memref<3x4xf32, #tpu.memory_space<smem>>
    %c0_63 = arith.constant 0 : index
    %c1_64 = arith.constant 1 : index
    %c0_65 = arith.constant 0 : index
    %c0_66 = arith.constant 0 : index
    %54 = vector.load %arg2[%c0_63, %c1_64, %c0_65, %c0_66] : memref<2x4x2x128xf32, #tpu.memory_space<vmem>>, vector<2x1x2x128xf32>
    %55 = vector.broadcast %53 : f32 to vector<2x1x2x128xf32>
    %56 = arith.mulf %55, %54 : vector<2x1x2x128xf32>
    %57 = arith.addf %52, %56 : vector<2x1x2x128xf32>
    %c2_67 = arith.constant 2 : index
    %c2_68 = arith.constant 2 : index
    %58 = memref.load %arg3[%c2_67, %c2_68] : memref<3x4xf32, #tpu.memory_space<smem>>
    %c0_69 = arith.constant 0 : index
    %c2_70 = arith.constant 2 : index
    %c0_71 = arith.constant 0 : index
    %c0_72 = arith.constant 0 : index
    %59 = vector.load %arg2[%c0_69, %c2_70, %c0_71, %c0_72] : memref<2x4x2x128xf32, #tpu.memory_space<vmem>>, vector<2x1x2x128xf32>
    %60 = vector.broadcast %58 : f32 to vector<2x1x2x128xf32>
    %61 = arith.mulf %60, %59 : vector<2x1x2x128xf32>
    %62 = arith.addf %57, %61 : vector<2x1x2x128xf32>
    %c2_73 = arith.constant 2 : index
    %c3_74 = arith.constant 3 : index
    %63 = memref.load %arg3[%c2_73, %c3_74] : memref<3x4xf32, #tpu.memory_space<smem>>
    %c0_75 = arith.constant 0 : index
    %c3_76 = arith.constant 3 : index
    %c0_77 = arith.constant 0 : index
    %c0_78 = arith.constant 0 : index
    %64 = vector.load %arg2[%c0_75, %c3_76, %c0_77, %c0_78] : memref<2x4x2x128xf32, #tpu.memory_space<vmem>>, vector<2x1x2x128xf32>
    %65 = vector.broadcast %63 : f32 to vector<2x1x2x128xf32>
    %66 = arith.mulf %65, %64 : vector<2x1x2x128xf32>
    %67 = arith.addf %62, %66 : vector<2x1x2x128xf32>
    %c0_79 = arith.constant 0 : index
    %c2_80 = arith.constant 2 : index
    %c0_81 = arith.constant 0 : index
    %c0_82 = arith.constant 0 : index
    %68 = vector.load %arg5[%c0_79, %c2_80, %c0_81, %c0_82] : memref<2x3x2x128xf32, #tpu.memory_space<vmem>>, vector<2x1x2x128xf32>
    tpu.vector_store %arg5[%c0_79, %c2_80, %c0_81, %c0_82], %67 {strides = array<i32>} : memref<2x3x2x128xf32, #tpu.memory_space<vmem>>, vector<2x1x2x128xf32>,
    return
  }
  func.func @transform_0(%arg0: i32, %arg1: i32) -> (i32, i32, i32, i32) {
    %c0_i32 = arith.constant 0 : i32
    %c0_i32_0 = arith.constant 0 : i32
    %c0_i32_1 = arith.constant 0 : i32
    return %arg0, %c0_i32, %arg1, %c0_i32_0 : i32, i32, i32, i32
  }
  func.func @transform_1(%arg0: i32, %arg1: i32) -> (i32, i32) {
    %c0_i32 = arith.constant 0 : i32
    %c0_i32_0 = arith.constant 0 : i32
    %c0_i32_1 = arith.constant 0 : i32
    return %c0_i32, %c0_i32_0 : i32, i32
  }
  func.func @transform_2(%arg0: i32, %arg1: i32) -> i32 {
    %c0_i32 = arith.constant 0 : i32
    %c0_i32_0 = arith.constant 0 : i32
    return %c0_i32 : i32
  }
  func.func @transform_3(%arg0: i32, %arg1: i32) -> (i32, i32, i32, i32) {
    %c0_i32 = arith.constant 0 : i32
    %c0_i32_0 = arith.constant 0 : i32
    %c0_i32_1 = arith.constant 0 : i32
    return %arg0, %c0_i32, %arg1, %c0_i32_0 : i32, i32, i32, i32
  }
}

</mosaic_0001>

<llo_original>
// kernel: tpu_custom_call.1
$region0: #{tpu_custom_call.1}
  #allocation0 [shape = 'u32[]', space=smem, size = 0x4, offset = 0x4, fixed_abs, tag = 'smem constant byte address 0x4 - core index']
  #allocation1 [shape = 'u32[144,128]{1,0:T(1,128)}', space=vmem, size = 0x12000, scoped, tag = 'internal scratch']
  %s0 = inlined_call_operand.hbm [shape: f32[2,4,2,128], index: 0, kind: input, shape index: {}]
  %s1 = inlined_call_operand.hbm [shape: f32[3,4], index: 1, kind: input, shape index: {}]
  %s2 = inlined_call_operand.vmem [shape: f32[3], index: 2, kind: input, shape index: {}]
  %s3 = inlined_call_operand.hbm [shape: f32[2,3,2,128], index: 3, kind: output, shape index: {}]
  %s4 = sld [smem:[#allocation0]]
  $region34: #{tpu_custom_call.1} parent=0
    _
  %s6 = ssub.s32 1, %s4
  %s7 = scalar_select 0, %s6, %s4
  $region1: #{tpu_custom_call.1} parent=0
    #allocation2 [shape = 'u8[8192]{0}', space=vmem, size = 0x2000, scoped, tag = 'input window, operand 0, single buffered']
    #allocation3 [shape = 's32[1]{0}', space=sflag, size = 0x4, scoped, tag = 'scoped memory for tpu_custom_call.1']
    #allocation4 [shape = 's32[1]{0}', space=sflag, size = 0x4, scoped, tag = 'scoped memory for tpu_custom_call.1']
    #allocation5 [shape = 's32[1]{0}', space=sflag, size = 0x4, scoped, tag = 'scoped memory for tpu_custom_call.1']
    #allocation6 [shape = 's32[1]{0}', space=sflag, size = 0x4, scoped, tag = 'scoped memory for tpu_custom_call.1']
    #allocation7 [shape = 'u8[2048]{0}', space=smem, size = 0x800, scoped, tag = 'input window, operand 1, single buffered']
    #allocation8 [shape = 'u8[512]{0}', space=smem, size = 0x200, scoped, tag = 'input window, operand 2, single buffered']
    #allocation9 [shape = 'u8[6144]{0}', space=vmem, size = 0x1800, scoped, tag = 'output window, operand 0, single buffered']
    %8 = vsyncpa [#allocation3], 0
    %9 = vsyncpa [#allocation5], 0
    %10 = vsyncpa [#allocation6], 0
    %11 = vsyncpa [#allocation4], 0
    // Predicated region
    $region2: #{tpu_custom_call.1} parent=1 // pred_check
      _
    $region3: #{tpu_custom_call.1} parent=1 // pred_check_branch
      %13 = sbr.rel (0) target = $region5
    $region4: #{tpu_custom_call.1} parent=1 // pred_region
      %s15 = ssub.s32 256, 256
      %16 = vsyncadd [#allocation3], %s15
      %s17 = sshll.u32 [#allocation2], 4
      %s18 = int_to_ptr.vmem [resolvable:$true] %s17
      %23 = dma.hbm_to_vmem [thread:$0]  %s0, 256, %s18, [#allocation3], 32, 32, 2
    $region5: #{tpu_custom_call.1} parent=1 // pred_fallthru
      _
    // Predicated region
    $region6: #{tpu_custom_call.1} parent=1 // pred_check
      _
    $region7: #{tpu_custom_call.1} parent=1 // pred_check_branch
      %25 = sbr.rel (0) target = $region9
    $region8: #{tpu_custom_call.1} parent=1 // pred_region
      %s27 = ssub.s32 64, 64
      %28 = vsyncadd [#allocation5], %s27
      %31 = dma.hbm_to_smem %s1, 64, [#allocation7], [#allocation5]
    $region9: #{tpu_custom_call.1} parent=1 // pred_fallthru
      _
    // Predicated region
    $region10: #{tpu_custom_call.1} parent=1 // pred_check
      _
    $region11: #{tpu_custom_call.1} parent=1 // pred_check_branch
      %33 = sbr.rel (0) target = $region13
    $region12: #{tpu_custom_call.1} parent=1 // pred_region
      %s35 = ssub.s32 16, 16
      %36 = vsyncadd [#allocation6], %s35
      %s38 = sshll.u32 %s2, 4
      %s39 = int_to_ptr.vmem [resolvable:$true] %s38
      %41 = dma.vmem_to_smem %s39, 16, [#allocation8], [#allocation6]
    $region13: #{tpu_custom_call.1} parent=1 // pred_fallthru
      _
    // Predicated region
    $region14: #{tpu_custom_call.1} parent=1 // pred_check
      _
    $region15: #{tpu_custom_call.1} parent=1 // pred_check_branch
      %43 = sbr.rel (0) target = $region17
    $region16: #{tpu_custom_call.1} parent=1 // pred_region
      %44 = dma.done [#allocation3], 256
    $region17: #{tpu_custom_call.1} parent=1 // pred_fallthru
      _
    // Predicated region
    $region18: #{tpu_custom_call.1} parent=1 // pred_check
      _
    $region19: #{tpu_custom_call.1} parent=1 // pred_check_branch
      %46 = sbr.rel (0) target = $region21
    $region20: #{tpu_custom_call.1} parent=1 // pred_region
      %47 = dma.done [#allocation5], 64
    $region21: #{tpu_custom_call.1} parent=1 // pred_fallthru
      _
    // Predicated region
    $region22: #{tpu_custom_call.1} parent=1 // pred_check
      _
    $region23: #{tpu_custom_call.1} parent=1 // pred_check_branch
      %49 = sbr.rel (0) target = $region25
    $region24: #{tpu_custom_call.1} parent=1 // pred_region
      %50 = dma.done [#allocation6], 16
    $region25: #{tpu_custom_call.1} parent=1 // pred_fallthru
      _
    %51 = sfence
    %s52 = sld [smem:[#allocation7]]
    %v53 = vld [vmem:[#allocation2] sm:$0x3]
    %v54 = vld [vmem:[#allocation2 + $0x8] sm:$0x3]
    %v55 = vstv %s52
    %v56 = vmul.f32 %v55, %v53
    %v57 = vmul.f32 %v55, %v54
    %s58 = sld [smem:[#allocation8]]
    %v59 = vstv %s58
    %v60 = vadd.f32 %v56, %v59
    %v61 = vadd.f32 %v57, %v59
    %s62 = sld [smem:[#allocation7 + $0x1]]
    %s63 = scalar_lea.vmem [#allocation2], 2
    %v64 = vld [vmem:[%s63] sm:$0x3]
    %v65 = vld [vmem:[%s63 + $0x8] sm:$0x3]
    %v66 = vstv %s62
    %v67 = vmul.f32 %v66, %v64
    %v68 = vmul.f32 %v66, %v65
    %v69 = vadd.f32 %v60, %v67
    %v70 = vadd.f32 %v61, %v68
    %s71 = sld [smem:[#allocation7 + $0x2]]
    %s72 = scalar_lea.vmem [#allocation2], 4
    %v73 = vld [vmem:[%s72] sm:$0x3]
    %v74 = vld [vmem:[%s72 + $0x8] sm:$0x3]
    %v75 = vstv %s71
    %v76 = vmul.f32 %v75, %v73
    %v77 = vmul.f32 %v75, %v74
    %v78 = vadd.f32 %v69, %v76
    %v79 = vadd.f32 %v70, %v77
    %s80 = sld [smem:[#allocation7 + $0x3]]
    %s81 = scalar_lea.vmem [#allocation2], 6
    %v82 = vld [vmem:[%s81] sm:$0x3]
    %v83 = vld [vmem:[%s81 + $0x8] sm:$0x3]
    %v84 = vstv %s80
    %v85 = vmul.f32 %v84, %v82
    %v86 = vmul.f32 %v84, %v83
    %v87 = vadd.f32 %v78, %v85
    %v88 = vadd.f32 %v79, %v86
    %89 = vst [vmem:[#allocation9] sm:$0x3] %v87
    %90 = vst [vmem:[#allocation9 + $0x6] sm:$0x3] %v88
    %s91 = sld [smem:[#allocation7 + $0x80]]
    %v92 = vld [vmem:[#allocation2] sm:$0x3]
    %v93 = vld [vmem:[#allocation2 + $0x8] sm:$0x3]
    %v94 = vstv %s91
    %v95 = vmul.f32 %v94, %v92
    %v96 = vmul.f32 %v94, %v93
    %s97 = sld [smem:[#allocation8 + $0x1]]
    %v98 = vstv %s97
    %v99 = vadd.f32 %v95, %v98
    %v100 = vadd.f32 %v96, %v98
    %s101 = sld [smem:[#allocation7 + $0x81]]
    %v102 = vld [vmem:[%s63] sm:$0x3]
    %v103 = vld [vmem:[%s63 + $0x8] sm:$0x3]
    %v104 = vstv %s101
    %v105 = vmul.f32 %v104, %v102
    %v106 = vmul.f32 %v104, %v103
    %v107 = vadd.f32 %v99, %v105
    %v108 = vadd.f32 %v100, %v106
    %s109 = sld [smem:[#allocation7 + $0x82]]
    %v110 = vld [vmem:[%s72] sm:$0x3]
    %v111 = vld [vmem:[%s72 + $0x8] sm:$0x3]
    %v112 = vstv %s109
    %v113 = vmul.f32 %v112, %v110
    %v114 = vmul.f32 %v112, %v111
    %v115 = vadd.f32 %v107, %v113
    %v116 = vadd.f32 %v108, %v114
    %s117 = sld [smem:[#allocation7 + $0x83]]
    %v118 = vld [vmem:[%s81] sm:$0x3]
    %v119 = vld [vmem:[%s81 + $0x8] sm:$0x3]
    %v120 = vstv %s117
    %v121 = vmul.f32 %v120, %v118
    %v122 = vmul.f32 %v120, %v119
    %v123 = vadd.f32 %v115, %v121
    %v124 = vadd.f32 %v116, %v122
    %s125 = scalar_lea.vmem [#allocation9], 2
    %126 = vst [vmem:[%s125] sm:$0x3] %v123
    %127 = vst [vmem:[%s125 + $0x6] sm:$0x3] %v124
    %s128 = sld [smem:[#allocation7 + $0x100]]
    %v129 = vld [vmem:[#allocation2] sm:$0x3]
    %v130 = vld [vmem:[#allocation2 + $0x8] sm:$0x3]
    %v131 = vstv %s128
    %v132 = vmul.f32 %v131, %v129
    %v133 = vmul.f32 %v131, %v130
    %s134 = sld [smem:[#allocation8 + $0x2]]
    %v135 = vstv %s134
    %v136 = vadd.f32 %v132, %v135
    %v137 = vadd.f32 %v133, %v135
    %s138 = sld [smem:[#allocation7 + $0x101]]
    %v139 = vld [vmem:[%s63] sm:$0x3]
    %v140 = vld [vmem:[%s63 + $0x8] sm:$0x3]
    %v141 = vstv %s138
    %v142 = vmul.f32 %v141, %v139
    %v143 = vmul.f32 %v141, %v140
    %v144 = vadd.f32 %v136, %v142
    %v145 = vadd.f32 %v137, %v143
    %s146 = sld [smem:[#allocation7 + $0x102]]
    %v147 = vld [vmem:[%s72] sm:$0x3]
    %v148 = vld [vmem:[%s72 + $0x8] sm:$0x3]
    %v149 = vstv %s146
    %v150 = vmul.f32 %v149, %v147
    %v151 = vmul.f32 %v149, %v148
    %v152 = vadd.f32 %v144, %v150
    %v153 = vadd.f32 %v145, %v151
    %s154 = sld [smem:[#allocation7 + $0x103]]
    %v155 = vld [vmem:[%s81] sm:$0x3]
    %v156 = vld [vmem:[%s81 + $0x8] sm:$0x3]
    %v157 = vstv %s154
    %v158 = vmul.f32 %v157, %v155
    %v159 = vmul.f32 %v157, %v156
    %v160 = vadd.f32 %v152, %v158
    %v161 = vadd.f32 %v153, %v159
    %s162 = scalar_lea.vmem [#allocation9], 4
    %163 = vst [vmem:[%s162] sm:$0x3] %v160
    %164 = vst [vmem:[%s162 + $0x6] sm:$0x3] %v161
    // Predicated region
    $region26: #{tpu_custom_call.1} parent=1 // pred_check
      _
    $region27: #{tpu_custom_call.1} parent=1 // pred_check_branch
      %166 = sbr.rel (0) target = $region29
    $region28: #{tpu_custom_call.1} parent=1 // pred_region
      %s168 = ssub.s32 192, 192
      %169 = vsyncadd [#allocation4], %s168
      %s170 = sshll.u32 [#allocation9], 4
      %s171 = int_to_ptr.vmem [resolvable:$true] %s170
      %176 = dma.vmem_to_hbm [thread:$0]  %s171, 192, %s3, [#allocation4], 32, 32, 2
    $region29: #{tpu_custom_call.1} parent=1 // pred_fallthru
      _
    // Predicated region
    $region30: #{tpu_custom_call.1} parent=1 // pred_check
      _
    $region31: #{tpu_custom_call.1} parent=1 // pred_check_branch
      %178 = sbr.rel (0) target = $region33
    $region32: #{tpu_custom_call.1} parent=1 // pred_region
      %179 = dma.done [#allocation4], 192
    $region33: #{tpu_custom_call.1} parent=1 // pred_fallthru
      _
    %180 = vsyncpa [#allocation3], 1
    %181 = vsyncpa [#allocation4], 1
    %182 = vsyncpa [#allocation5], 1
    %183 = vsyncpa [#allocation6], 1

</llo_original>
